<compile_context>
chip_gen: v7x
topology: tpu7x:2x2x1
jax: 0.10.0
libtpu: 0.0.40
codegen_flags: <defaults>
</compile_context>

<pallas_src>
import jax
import jax.numpy as jnp
from jax.experimental import pallas as pl
from jax.experimental.pallas import tpu as pltpu

_LANE = 128
_VMEM_BUDGET = 56 << 20   # conservative: v7x has 64 MiB physical VMEM per TC
_VMEM_FLOOR = 32 << 20    # never set the scoped limit below the common default
_VMEM_CAP = 128 << 20


def _round_up(n, m):
    return ((n + m - 1) // m) * m


def dqn_kernel(x_ref, w1_ref, b1_ref, w2_ref, b2_ref, w3_ref, b3_ref, out_ref):
    """Fused 3-layer MLP. MXU matmuls accumulate in f32; bias/ReLU stay f32."""
    # Cast x to the weight dtype in-kernel (free VPU work under the MXU) so the
    # wrapper never materializes a separate bf16 copy of x in HBM.
    x = x_ref[...].astype(w1_ref.dtype)
    h1 = jnp.dot(x, w1_ref[...], preferred_element_type=jnp.float32) + b1_ref[...]
    h1 = jnp.maximum(h1, 0.0).astype(w2_ref.dtype)
    h2 = jnp.dot(h1, w2_ref[...], preferred_element_type=jnp.float32) + b2_ref[...]
    h2 = jnp.maximum(h2, 0.0).astype(w3_ref.dtype)
    out_ref[...] = (
        jnp.dot(h2, w3_ref[...], preferred_element_type=jnp.float32) + b3_ref[...]
    ).astype(out_ref.dtype)


def prepare_params(params, compute_dtype=jnp.float32):
    """One-time prep: pad hidden/output feature dims to 128 lanes and cast the
    weights to the MXU compute dtype.

    Call once whenever the parameters change and reuse the result across
    forward calls -- this keeps all padding / casting HBM traffic off the
    per-call path.  Padding is numerically exact: padded hidden columns get
    zero weights and zero bias (ReLU(0)=0) and zero outgoing weight rows;
    padded output columns are sliced off in dqn_forward.  The input-feature
    dim of w1 is NOT padded (x is consumed unpadded).

    Weights are stored (in_features, out_features) (transpose of torch's
    Linear.weight); biases as (1, out_features).
    compute_dtype=jnp.bfloat16 halves weight DMA and hits the fast MXU path on
    v5e/v6e/v7x (accumulation stays f32); default f32 matches torch exactly.
    """
    w1, w2, w3 = params["w1"], params["w2"], params["w3"]
    b1 = jnp.reshape(params["b1"], (1, -1))
    b2 = jnp.reshape(params["b2"], (1, -1))
    b3 = jnp.reshape(params["b3"], (1, -1))

    in_dim, hid1 = w1.shape
    hid2 = w2.shape[1]
    out_dim = w3.shape[1]
    h1_p, h2_p, out_p = (_round_up(d, _LANE) for d in (hid1, hid2, out_dim))

    def pad(a, rows, cols, dtype):
        pr, pc = rows - a.shape[0], cols - a.shape[1]
        if pr or pc:                      # no-op when already aligned
            a = jnp.pad(a, ((0, pr), (0, pc)))
        return a.astype(dtype)

    return {
        "w1": pad(w1, in_dim, h1_p, compute_dtype),
        "b1": pad(b1, 1, h1_p, jnp.float32),
        "w2": pad(w2, h1_p, h2_p, compute_dtype),
        "b2": pad(b2, 1, h2_p, jnp.float32),
        "w3": pad(w3, h2_p, out_p, compute_dtype),
        "b3": pad(b3, 1, out_p, jnp.float32),
        "out_dim": out_dim,
    }


def dqn_forward(x, prepared, *, block_batch=1024):
    """x: [B, input_dim] float32.  prepared: output of prepare_params."""
    w1, b1 = prepared["w1"], prepared["b1"]
    w2, b2 = prepared["w2"], prepared["b2"]
    w3, b3 = prepared["w3"], prepared["b3"]
    out_dim = prepared["out_dim"]

    B, in_dim = x.shape
    assert in_dim == w1.shape[0], "input_dim mismatch with prepared params"
    h1_p, h2_p, out_p = w1.shape[1], w2.shape[1], w3.shape[1]

    # Native sublane tile: 8 rows for f32 operands, 16 for bf16.
    sub = 16 if w1.dtype == jnp.bfloat16 else 8

    weight_bytes = sum(int(a.size) * a.dtype.itemsize for a in (w1, w2, w3))
    bias_bytes = sum(int(a.size) * a.dtype.itemsize for a in (b1, b2, b3))
    x_item = x.dtype.itemsize

    flops = 2 * B * (in_dim * h1_p + h1_p * h2_p + h2_p * out_p)
    bytes_accessed = int(B * in_dim * x_item + weight_bytes + bias_bytes
                         + B * out_p * 4)
    cost = pl.CostEstimate(flops=int(flops), transcendentals=0,
                           bytes_accessed=bytes_accessed)

    def vmem_limit(need):
        return int(min(max(int(need * 1.25) + (2 << 20), _VMEM_FLOOR), _VMEM_CAP))

    args = (x, w1, b1, w2, b2, w3, b3)

    # ---- Fast path: whole batch in one invocation, no grid / pipeline. ------
    fast_need = (weight_bytes + bias_bytes
                 + B * in_dim * x_item + B * out_p * 4)
    if B <= block_batch and fast_need <= _VMEM_BUDGET:
        out_padded = pl.pallas_call(
            dqn_kernel,
            out_shape=jax.ShapeDtypeStruct((B, out_p), jnp.float32),
            compiler_params=pltpu.CompilerParams(
                vmem_limit_bytes=vmem_limit(fast_need)),
            cost_estimate=cost,
        )(*args)
        return out_padded[:, :out_dim] if out_p != out_dim else out_padded

    # ---- Tiled path: 1-D grid over the batch, resident weights. -------------
    # Evenly split the batch so clipped rows stay below one tile; >= 2 grid
    # steps whenever B > block_batch so v7x's two TensorCores both get work.
    n_steps = pl.cdiv(B, block_batch)
    tb = _round_up(pl.cdiv(B, n_steps), sub)

    def tile_need(t, wbuf=1):
        return (wbuf * (weight_bytes + bias_bytes)
                + 2 * t * (in_dim * x_item + out_p * 4))

    while tb > sub and tile_need(tb) > _VMEM_BUDGET:
        tb = max(sub, _round_up(tb // 2, sub))
    # TODO(synk): if the weights alone exceed the VMEM budget (hidden_dim of a
    # few thousand in f32), tile fc2/fc3 over their output dim instead of
    # keeping all three weight matrices resident.
    grid = (pl.cdiv(B, tb),)

    def build(single_buffer_weights):
        wbuf = 1 if single_buffer_weights else 2
        wkw = {"pipeline_mode": pl.Buffered(1)} if single_buffer_weights else {}
        resident = lambda i: (0, 0)
        return pl.pallas_call(
            dqn_kernel,
            out_shape=jax.ShapeDtypeStruct((B, out_p), jnp.float32),
            grid=grid,
            in_specs=[
                pl.BlockSpec((tb, in_dim), lambda i: (i, 0)),   # x (batch-tiled)
                pl.BlockSpec((in_dim, h1_p), resident, **wkw),  # w1
                pl.BlockSpec((1, h1_p), resident, **wkw),       # b1
                pl.BlockSpec((h1_p, h2_p), resident, **wkw),    # w2
                pl.BlockSpec((1, h2_p), resident, **wkw),       # b2
                pl.BlockSpec((h2_p, out_p), resident, **wkw),   # w3
                pl.BlockSpec((1, out_p), resident, **wkw),      # b3
            ],
            out_specs=pl.BlockSpec((tb, out_p), lambda i: (i, 0)),
            compiler_params=pltpu.CompilerParams(
                dimension_semantics=("parallel",),
                vmem_limit_bytes=vmem_limit(tile_need(tb, wbuf)),
            ),
            cost_estimate=cost,
        )

    try:
        out_padded = build(single_buffer_weights=True)(*args)
    except Exception:
        # pipeline_mode=pl.Buffered may be unsupported on some jax versions;
        # fall back to the default double-buffered resident weights (costs
        # VMEM, not time).
        out_padded = build(single_buffer_weights=False)(*args)

    return out_padded[:, :out_dim] if out_p != out_dim else out_padded


def init_params(key, input_dim, hidden_dim, output_dim):
    """Deterministic synthetic init (uniform, torch-Linear-like fan_in scaling)."""
    keys = jax.random.split(key, 6)

    def lin(kw, kb, fan_in, fan_out):
        bound = 1.0 / jnp.sqrt(fan_in)
        # stored as (in, out) == transpose of torch's (out, in)
        w = jax.random.uniform(kw, (fan_in, fan_out), jnp.float32, -bound, bound)
        b = jax.random.uniform(kb, (1, fan_out), jnp.float32, -bound, bound)
        return w, b

    w1, b1 = lin(keys[0], keys[1], input_dim, hidden_dim)
    w2, b2 = lin(keys[2], keys[3], hidden_dim, hidden_dim)
    w3, b3 = lin(keys[4], keys[5], hidden_dim, output_dim)
    return {"w1": w1, "b1": b1, "w2": w2, "b2": b2, "w3": w3, "b3": b3}


def reference_forward(x, p):
    h1 = jnp.maximum(x @ p["w1"] + p["b1"], 0.0)
    h2 = jnp.maximum(h1 @ p["w2"] + p["b2"], 0.0)
    return h2 @ p["w3"] + p["b3"]


if __name__ == "__main__":
    key = jax.random.PRNGKey(0)
    k_x, k_p, k_x2 = jax.random.split(key, 3)

    batch, input_dim, hidden_dim, output_dim = 8, 16, 32, 4

    x = jax.random.normal(k_x, (batch, input_dim), jnp.float32)
    params = init_params(k_p, input_dim, hidden_dim, output_dim)
    ref = reference_forward(x, params)

    # f32 path, small batch -> no-grid fast path.
    p_f32 = prepare_params(params, compute_dtype=jnp.float32)
    out = jax.block_until_ready(dqn_forward(x, p_f32))
    assert out.shape == (batch, output_dim)
    assert jnp.allclose(out, ref, atol=1e-5, rtol=1e-5)

    # bf16-weight / f32-accumulate path (MXU fast mode): looser tolerance.
    p_bf16 = prepare_params(params, compute_dtype=jnp.bfloat16)
    out_bf = jax.block_until_ready(dqn_forward(x, p_bf16))
    assert out_bf.shape == (batch, output_dim)
    assert jnp.allclose(out_bf, ref, atol=5e-2, rtol=5e-2)

    # Larger, non-aligned batch with a small block_batch to exercise the tiled
    # pipelined path (cdiv grid, clipped last tile, resident weights).
    B2 = 300
    x2 = jax.random.normal(k_x2, (B2, input_dim), jnp.float32)
    ref2 = reference_forward(x2, params)

    out2 = jax.block_until_ready(dqn_forward(x2, p_f32, block_batch=128))
    assert out2.shape == (B2, output_dim)
    assert jnp.allclose(out2, ref2, atol=1e-4, rtol=1e-4)

    out2_bf = jax.block_until_ready(dqn_forward(x2, p_bf16, block_batch=128))
    assert out2_bf.shape == (B2, output_dim)
    assert jnp.allclose(out2_bf, ref2, atol=5e-2, rtol=5e-2)

    print("KERNEL_OK")
</pallas_src>

<mosaic_0001>
module attributes {stable_mosaic.version = 11 : i64} {
  func.func @dqn_kernel(%arg0: memref<8x16xf32, #tpu.memory_space<vmem>>, %arg1: memref<16x128xf32, #tpu.memory_space<vmem>>, %arg2: memref<1x128xf32, #tpu.memory_space<vmem>>, %arg3: memref<128x128xf32, #tpu.memory_space<vmem>>, %arg4: memref<1x128xf32, #tpu.memory_space<vmem>>, %arg5: memref<128x128xf32, #tpu.memory_space<vmem>>, %arg6: memref<1x128xf32, #tpu.memory_space<vmem>>, %arg7: memref<8x128xf32, #tpu.memory_space<vmem>>) attributes {dimension_semantics = [], scalar_prefetch = 0 : i64, scratch_operands = 0 : i64, tpu.core_type = #tpu.core_type<tc>} {
    %c0 = arith.constant 0 : index
    %c0_0 = arith.constant 0 : index
    %0 = vector.load %arg0[%c0, %c0_0] : memref<8x16xf32, #tpu.memory_space<vmem>>, vector<8x16xf32>
    %c0_1 = arith.constant 0 : index
    %c0_2 = arith.constant 0 : index
    %1 = vector.load %arg1[%c0_1, %c0_2] : memref<16x128xf32, #tpu.memory_space<vmem>>, vector<16x128xf32>
    %cst = arith.constant dense<0.000000e+00> : vector<8x128xf32>
    %2 = tpu.matmul %0, %1, %cst {dimension_numbers = #tpu.dot_dimension_numbers<[1], [0], [0], [1], [0, 0, 1, 1], [], []>} : vector<8x16xf32>, vector<16x128xf32>, vector<8x128xf32> -> vector<8x128xf32>
    %c0_3 = arith.constant 0 : index
    %c0_4 = arith.constant 0 : index
    %3 = vector.load %arg2[%c0_3, %c0_4] : memref<1x128xf32, #tpu.memory_space<vmem>>, vector<1x128xf32>
    %4 = vector.broadcast %3 : vector<1x128xf32> to vector<8x128xf32>
    %5 = arith.addf %2, %4 : vector<8x128xf32>
    %cst_5 = arith.constant 0.000000e+00 : f32
    %6 = vector.broadcast %cst_5 : f32 to vector<8x128xf32>
    %7 = arith.maximumf %5, %6 : vector<8x128xf32>
    %c0_6 = arith.constant 0 : index
    %c0_7 = arith.constant 0 : index
    %8 = vector.load %arg3[%c0_6, %c0_7] : memref<128x128xf32, #tpu.memory_space<vmem>>, vector<128x128xf32>
    %cst_8 = arith.constant dense<0.000000e+00> : vector<8x128xf32>
    %9 = tpu.matmul %7, %8, %cst_8 {dimension_numbers = #tpu.dot_dimension_numbers<[1], [0], [0], [1], [0, 0, 1, 1], [], []>} : vector<8x128xf32>, vector<128x128xf32>, vector<8x128xf32> -> vector<8x128xf32>
    %c0_9 = arith.constant 0 : index
    %c0_10 = arith.constant 0 : index
    %10 = vector.load %arg4[%c0_9, %c0_10] : memref<1x128xf32, #tpu.memory_space<vmem>>, vector<1x128xf32>
    %11 = vector.broadcast %10 : vector<1x128xf32> to vector<8x128xf32>
    %12 = arith.addf %9, %11 : vector<8x128xf32>
    %cst_11 = arith.constant 0.000000e+00 : f32
    %13 = vector.broadcast %cst_11 : f32 to vector<8x128xf32>
    %14 = arith.maximumf %12, %13 : vector<8x128xf32>
    %c0_12 = arith.constant 0 : index
    %c0_13 = arith.constant 0 : index
    %15 = vector.load %arg5[%c0_12, %c0_13] : memref<128x128xf32, #tpu.memory_space<vmem>>, vector<128x128xf32>
    %cst_14 = arith.constant dense<0.000000e+00> : vector<8x128xf32>
    %16 = tpu.matmul %14, %15, %cst_14 {dimension_numbers = #tpu.dot_dimension_numbers<[1], [0], [0], [1], [0, 0, 1, 1], [], []>} : vector<8x128xf32>, vector<128x128xf32>, vector<8x128xf32> -> vector<8x128xf32>
    %c0_15 = arith.constant 0 : index
    %c0_16 = arith.constant 0 : index
    %17 = vector.load %arg6[%c0_15, %c0_16] : memref<1x128xf32, #tpu.memory_space<vmem>>, vector<1x128xf32>
    %18 = vector.broadcast %17 : vector<1x128xf32> to vector<8x128xf32>
    %19 = arith.addf %16, %18 : vector<8x128xf32>
    %c0_17 = arith.constant 0 : index
    %c0_18 = arith.constant 0 : index
    %20 = vector.load %arg7[%c0_17, %c0_18] : memref<8x128xf32, #tpu.memory_space<vmem>>, vector<8x128xf32>
    tpu.vector_store %arg7[%c0_17, %c0_18], %19 {strides = array<i32>} : memref<8x128xf32, #tpu.memory_space<vmem>>, vector<8x128xf32>,
    return
  }
}

</mosaic_0001>

<llo_original>
// kernel: tpu_custom_call.1
$region0: #{tpu_custom_call.1}
  #allocation0 [shape = 'u32[]', space=smem, size = 0x4, offset = 0x4, fixed_abs, tag = 'smem constant byte address 0x4 - core index']
  #allocation1 [shape = 'u32[144,128]{1,0:T(1,128)}', space=vmem, size = 0x12000, scoped, tag = 'internal scratch']
  %s0 = inlined_call_operand.hbm [shape: f32[8,16], index: 0, kind: input, shape index: {}]
  %s1 = inlined_call_operand.hbm [shape: f32[16,128], index: 1, kind: input, shape index: {}]
  %s2 = inlined_call_operand.vmem [shape: f32[1,128], index: 2, kind: input, shape index: {}]
  %s3 = inlined_call_operand.hbm [shape: f32[128,128], index: 3, kind: input, shape index: {}]
  %s4 = inlined_call_operand.vmem [shape: f32[1,128], index: 4, kind: input, shape index: {}]
  %s5 = inlined_call_operand.hbm [shape: f32[128,128], index: 5, kind: input, shape index: {}]
  %s6 = inlined_call_operand.vmem [shape: f32[1,128], index: 6, kind: input, shape index: {}]
  %s7 = inlined_call_operand.hbm [shape: f32[8,128], index: 7, kind: output, shape index: {}]
  %s8 = sld [smem:[#allocation0]]
  $region54: #{tpu_custom_call.1} parent=0
    _
  %s10 = ssub.s32 1, %s8
  %s11 = scalar_select 0, %s10, %s8
  $region1: #{tpu_custom_call.1} parent=0
    #allocation2 [shape = 'u8[4096]{0}', space=vmem, size = 0x1000, scoped, tag = 'input window, operand 0, single buffered']
    #allocation3 [shape = 's32[1]{0}', space=sflag, size = 0x4, scoped, tag = 'scoped memory for tpu_custom_call.1']
    #allocation4 [shape = 's32[1]{0}', space=sflag, size = 0x4, scoped, tag = 'scoped memory for tpu_custom_call.1']
    #allocation5 [shape = 'u8[8192]{0}', space=vmem, size = 0x2000, scoped, tag = 'input window, operand 1, single buffered']
    #allocation6 [shape = 's32[1]{0}', space=sflag, size = 0x4, scoped, tag = 'scoped memory for tpu_custom_call.1']
    #allocation7 [shape = 'u8[65536]{0}', space=vmem, size = 0x10000, scoped, tag = 'input window, operand 3, single buffered']
    #allocation8 [shape = 'u8[65536]{0}', space=vmem, size = 0x10000, scoped, tag = 'input window, operand 5, single buffered']
    #allocation9 [shape = 's32[1]{0}', space=sflag, size = 0x4, scoped, tag = 'scoped memory for tpu_custom_call.1']
    #allocation10 [shape = 'u8[4096]{0}', space=vmem, size = 0x1000, scoped, tag = 'output window, operand 0, single buffered']
    %12 = vsyncpa [#allocation3], 0
    %13 = vsyncpa [#allocation6], 0
    %14 = vsyncpa [#allocation9], 0
    %15 = vsyncpa [#allocation4], 0
    // Predicated region
    $region2: #{tpu_custom_call.1} parent=1 // pred_check
      _
    $region3: #{tpu_custom_call.1} parent=1 // pred_check_branch
      %17 = sbr.rel (0) target = $region5
    $region4: #{tpu_custom_call.1} parent=1 // pred_region
      %s19 = ssub.s32 128, 128
      %20 = vsyncadd [#allocation3], %s19
      %s22 = sshll.u32 [#allocation2], 4
      %s23 = int_to_ptr.vmem [resolvable:$true] %s22
      %25 = dma.hbm_to_vmem [thread:$0]  %s0, 128, %s23, [#allocation3]
    $region5: #{tpu_custom_call.1} parent=1 // pred_fallthru
      _
    // Predicated region
    $region6: #{tpu_custom_call.1} parent=1 // pred_check
      _
    $region7: #{tpu_custom_call.1} parent=1 // pred_check_branch
      %27 = sbr.rel (0) target = $region9
    $region8: #{tpu_custom_call.1} parent=1 // pred_region
      %s29 = ssub.s32 256, 256
      %30 = vsyncadd [#allocation6], %s29
      %s31 = sshll.u32 [#allocation5], 4
      %s32 = int_to_ptr.vmem [resolvable:$true] %s31
      %37 = dma.hbm_to_vmem [thread:$0]  %s1, 256, %s32, [#allocation6], 128, 128, 8
    $region9: #{tpu_custom_call.1} parent=1 // pred_fallthru
      _
    // Predicated region
    $region10: #{tpu_custom_call.1} parent=1 // pred_check
      _
    $region11: #{tpu_custom_call.1} parent=1 // pred_check_branch
      %39 = sbr.rel (0) target = $region13
    $region12: #{tpu_custom_call.1} parent=1 // pred_region
      _
    $region13: #{tpu_custom_call.1} parent=1 // pred_fallthru
      _
    // Predicated region
    $region14: #{tpu_custom_call.1} parent=1 // pred_check
      _
    $region15: #{tpu_custom_call.1} parent=1 // pred_check_branch
      %41 = sbr.rel (0) target = $region17
    $region16: #{tpu_custom_call.1} parent=1 // pred_region
      %s43 = ssub.s32 2048, 2048
      %44 = vsyncadd [#allocation6], %s43
      %s45 = sshll.u32 [#allocation7], 4
      %s46 = int_to_ptr.vmem [resolvable:$true] %s45
      %51 = dma.hbm_to_vmem [thread:$0]  %s3, 2048, %s46, [#allocation6], 128, 128, 8
    $region17: #{tpu_custom_call.1} parent=1 // pred_fallthru
      _
    // Predicated region
    $region18: #{tpu_custom_call.1} parent=1 // pred_check
      _
    $region19: #{tpu_custom_call.1} parent=1 // pred_check_branch
      %53 = sbr.rel (0) target = $region21
    $region20: #{tpu_custom_call.1} parent=1 // pred_region
      _
    $region21: #{tpu_custom_call.1} parent=1 // pred_fallthru
      _
    // Predicated region
    $region22: #{tpu_custom_call.1} parent=1 // pred_check
      _
    $region23: #{tpu_custom_call.1} parent=1 // pred_check_branch
      %55 = sbr.rel (0) target = $region25
    $region24: #{tpu_custom_call.1} parent=1 // pred_region
      %s57 = ssub.s32 2048, 2048
      %58 = vsyncadd [#allocation9], %s57
      %s59 = sshll.u32 [#allocation8], 4
      %s60 = int_to_ptr.vmem [resolvable:$true] %s59
      %65 = dma.hbm_to_vmem [thread:$0]  %s5, 2048, %s60, [#allocation9], 128, 128, 8
    $region25: #{tpu_custom_call.1} parent=1 // pred_fallthru
      _
    // Predicated region
    $region26: #{tpu_custom_call.1} parent=1 // pred_check
      _
    $region27: #{tpu_custom_call.1} parent=1 // pred_check_branch
      %67 = sbr.rel (0) target = $region29
    $region28: #{tpu_custom_call.1} parent=1 // pred_region
      _
    $region29: #{tpu_custom_call.1} parent=1 // pred_fallthru
      _
    // Predicated region
    $region30: #{tpu_custom_call.1} parent=1 // pred_check
      _
    $region31: #{tpu_custom_call.1} parent=1 // pred_check_branch
      %69 = sbr.rel (0) target = $region33
    $region32: #{tpu_custom_call.1} parent=1 // pred_region
      %70 = dma.done [#allocation3], 128
    $region33: #{tpu_custom_call.1} parent=1 // pred_fallthru
      _
    // Predicated region
    $region34: #{tpu_custom_call.1} parent=1 // pred_check
      _
    $region35: #{tpu_custom_call.1} parent=1 // pred_check_branch
      %72 = sbr.rel (0) target = $region37
    $region36: #{tpu_custom_call.1} parent=1 // pred_region
      %73 = dma.done [#allocation6], 256
    $region37: #{tpu_custom_call.1} parent=1 // pred_fallthru
      _
    // Predicated region
    $region38: #{tpu_custom_call.1} parent=1 // pred_check
      _
    $region39: #{tpu_custom_call.1} parent=1 // pred_check_branch
      %75 = sbr.rel (0) target = $region41
    $region40: #{tpu_custom_call.1} parent=1 // pred_region
      %76 = dma.done [#allocation6], 2048
    $region41: #{tpu_custom_call.1} parent=1 // pred_fallthru
      _
    // Predicated region
    $region42: #{tpu_custom_call.1} parent=1 // pred_check
      _
    $region43: #{tpu_custom_call.1} parent=1 // pred_check_branch
      %78 = sbr.rel (0) target = $region45
    $region44: #{tpu_custom_call.1} parent=1 // pred_region
      %79 = dma.done [#allocation9], 2048
    $region45: #{tpu_custom_call.1} parent=1 // pred_fallthru
      _
    %v80 = vld [vmem:[#allocation2] sm:$0xff]
    %v81 = vld [vmem:[#allocation5] sm:$0xff]
    %v82 = vld [vmem:[#allocation5 + $0x8] sm:$0xff]
    %v83 = vld [vmem:[%s2] sm:$0x1]
    %v85 = vlaneseq
    %v86 = vshrl.u32 %v85, 7
    %v87 = vsub.s32 0, %v86
    %v88 = vrot.slane %v83, %v87
    %vm90 = vcmask 130048
    %v92 = vsel %vm90, %v80, 0
    %94 = vmatprep.subr.mxu0 0.0
    %95 = vmatpush1.msra.mxu0 %v81
    %96 = vmatprep.subr.mxu0 0.0
    %97 = vmatpush1.msra.mxu0 %v82
    %98 = vmatprep.subr.mxu0 0.0
    %99 = vmatpush1.msra.mxu0 0.0
    %100 = vmatprep.subr.mxu0 0.0
    %101 = vmatpush1.msra.mxu0 0.0
    %102 = vmatprep.subr.mxu0 0.0
    %103 = vmatpush1.msra.mxu0 0.0
    %104 = vmatprep.subr.mxu0 0.0
    %105 = vmatpush1.msra.mxu0 0.0
    %106 = vmatprep.subr.mxu0 0.0
    %107 = vmatpush1.msra.mxu0 0.0
    %108 = vmatprep.subr.mxu0 0.0
    %109 = vmatpush1.msra.mxu0 0.0
    %110 = vmatprep.subr.mxu0 0.0
    %111 = vmatpush1.msra.mxu0 0.0
    %112 = vmatprep.subr.mxu0 0.0
    %113 = vmatpush1.msra.mxu0 0.0
    %114 = vmatprep.subr.mxu0 0.0
    %115 = vmatpush1.msra.mxu0 0.0
    %116 = vmatprep.subr.mxu0 0.0
    %117 = vmatpush1.msra.mxu0 0.0
    %118 = vmatprep.subr.mxu0 0.0
    %119 = vmatpush1.msra.mxu0 0.0
    %120 = vmatprep.subr.mxu0 0.0
    %121 = vmatpush1.msra.mxu0 0.0
    %122 = vmatprep.subr.mxu0 0.0
    %123 = vmatpush1.msra.mxu0 0.0
    %124 = vmatprep.subr.mxu0 0.0
    %125 = vmatpush1.msra.mxu0 0.0
    %126 = vmatprep.subr.mxu0 0.0
    %127 = vmatpush1.msra.mxu0 0.0
    %128 = vmatprep.subr.mxu0 0.0
    %129 = vmatpush1.msra.mxu0 0.0
    %130 = vmatprep.subr.mxu0 0.0
    %131 = vmatpush1.msra.mxu0 0.0
    %132 = vmatprep.subr.mxu0 0.0
    %133 = vmatpush1.msra.mxu0 0.0
    %134 = vmatprep.subr.mxu0 0.0
    %135 = vmatpush1.msra.mxu0 0.0
    %136 = vmatprep.subr.mxu0 0.0
    %137 = vmatpush1.msra.mxu0 0.0
    %138 = vmatprep.subr.mxu0 0.0
    %139 = vmatpush1.msra.mxu0 0.0
    %140 = vmatprep.subr.mxu0 0.0
    %141 = vmatpush1.msra.mxu0 0.0
    %142 = vmatprep.subr.mxu0 0.0
    %143 = vmatpush1.msra.mxu0 0.0
    %144 = vmatprep.subr.mxu0 0.0
    %145 = vmatpush1.msra.mxu0 0.0
    %146 = vmatprep.subr.mxu0 0.0
    %147 = vmatpush1.msra.mxu0 0.0
    %148 = vmatprep.subr.mxu0 0.0
    %149 = vmatpush1.msra.mxu0 0.0
    %150 = vmatprep.subr.mxu0 0.0
    %151 = vmatpush1.msra.mxu0 0.0
    %152 = vmatprep.subr.mxu0 0.0
    %153 = vmatpush1.msra.mxu0 0.0
    %154 = vmatprep.subr.mxu0 0.0
    %155 = vmatpush1.msra.mxu0 0.0
    %156 = vmatprep.subr.mxu0 0.0
    %157 = vmatpush1.msra.mxu0 0.0
    %158 = vmatprep.mubr.f32.mxu0 0.0
    %159 = vmatmul.mubr.f32.gmra.mrb[0].mxu0 %v92
    %v160 = vpop.f32.mrb[0].mxu0
    %v161 = vadd.f32 %v88, %v160
    %v162 = vpop.f32.mrb[0].mxu0
    %163 = vdwg.mxu0
    %v164 = vmax.f32 %v161, 0.0
    %v165 = vld [vmem:[#allocation7] sm:$0xff]
    %v166 = vld [vmem:[#allocation7 + $0x8] sm:$0xff]
    %v167 = vld [vmem:[#allocation7 + $0x10] sm:$0xff]
    %v168 = vld [vmem:[#allocation7 + $0x18] sm:$0xff]
    %v169 = vld [vmem:[#allocation7 + $0x20] sm:$0xff]
    %v170 = vld [vmem:[#allocation7 + $0x28] sm:$0xff]
    %v171 = vld [vmem:[#allocation7 + $0x30] sm:$0xff]
    %v172 = vld [vmem:[#allocation7 + $0x38] sm:$0xff]
    %v173 = vld [vmem:[#allocation7 + $0x40] sm:$0xff]
    %v174 = vld [vmem:[#allocation7 + $0x48] sm:$0xff]
    %v175 = vld [vmem:[#allocation7 + $0x50] sm:$0xff]
    %v176 = vld [vmem:[#allocation7 + $0x58] sm:$0xff]
    %v177 = vld [vmem:[#allocation7 + $0x60] sm:$0xff]
    %v178 = vld [vmem:[#allocation7 + $0x68] sm:$0xff]
    %v179 = vld [vmem:[#allocation7 + $0x70] sm:$0xff]
    %v180 = vld [vmem:[#allocation7 + $0x78] sm:$0xff]
    %v181 = vld [vmem:[%s4] sm:$0x1]
    %v183 = vlaneseq
    %v184 = vshrl.u32 %v183, 7
    %v185 = vsub.s32 0, %v184
    %v186 = vrot.slane %v181, %v185
    %188 = vmatprep.subr.mxu0 0.0
    %189 = vmatpush1.msra.mxu0 %v165
    %190 = vmatprep.subr.mxu0 0.0
    %191 = vmatpush1.msra.mxu0 %v166
    %192 = vmatprep.subr.mxu0 0.0
    %193 = vmatpush1.msra.mxu0 %v167
    %194 = vmatprep.subr.mxu0 0.0
    %195 = vmatpush1.msra.mxu0 %v168
    %196 = vmatprep.subr.mxu0 0.0
    %197 = vmatpush1.msra.mxu0 %v169
    %198 = vmatprep.subr.mxu0 0.0
    %199 = vmatpush1.msra.mxu0 %v170
    %200 = vmatprep.subr.mxu0 0.0
    %201 = vmatpush1.msra.mxu0 %v171
    %202 = vmatprep.subr.mxu0 0.0
    %203 = vmatpush1.msra.mxu0 %v172
    %204 = vmatprep.subr.mxu0 0.0
    %205 = vmatpush1.msra.mxu0 %v173
    %206 = vmatprep.subr.mxu0 0.0
    %207 = vmatpush1.msra.mxu0 %v174
    %208 = vmatprep.subr.mxu0 0.0
    %209 = vmatpush1.msra.mxu0 %v175
    %210 = vmatprep.subr.mxu0 0.0
    %211 = vmatpush1.msra.mxu0 %v176
    %212 = vmatprep.subr.mxu0 0.0
    %213 = vmatpush1.msra.mxu0 %v177
    %214 = vmatprep.subr.mxu0 0.0
    %215 = vmatpush1.msra.mxu0 %v178
    %216 = vmatprep.subr.mxu0 0.0
    %217 = vmatpush1.msra.mxu0 %v179
    %218 = vmatprep.subr.mxu0 0.0
    %219 = vmatpush1.msra.mxu0 %v180
    %220 = vmatprep.subr.mxu0 0.0
    %221 = vmatpush1.msra.mxu0 0.0
    %222 = vmatprep.subr.mxu0 0.0
    %223 = vmatpush1.msra.mxu0 0.0
    %224 = vmatprep.subr.mxu0 0.0
    %225 = vmatpush1.msra.mxu0 0.0
    %226 = vmatprep.subr.mxu0 0.0
    %227 = vmatpush1.msra.mxu0 0.0
    %228 = vmatprep.subr.mxu0 0.0
    %229 = vmatpush1.msra.mxu0 0.0
    %230 = vmatprep.subr.mxu0 0.0
    %231 = vmatpush1.msra.mxu0 0.0
    %232 = vmatprep.subr.mxu0 0.0
    %233 = vmatpush1.msra.mxu0 0.0
    %234 = vmatprep.subr.mxu0 0.0
    %235 = vmatpush1.msra.mxu0 0.0
    %236 = vmatprep.subr.mxu0 0.0
    %237 = vmatpush1.msra.mxu0 0.0
    %238 = vmatprep.subr.mxu0 0.0
    %239 = vmatpush1.msra.mxu0 0.0
    %240 = vmatprep.subr.mxu0 0.0
    %241 = vmatpush1.msra.mxu0 0.0
    %242 = vmatprep.subr.mxu0 0.0
    %243 = vmatpush1.msra.mxu0 0.0
    %244 = vmatprep.subr.mxu0 0.0
    %245 = vmatpush1.msra.mxu0 0.0
    %246 = vmatprep.subr.mxu0 0.0
    %247 = vmatpush1.msra.mxu0 0.0
    %248 = vmatprep.subr.mxu0 0.0
    %249 = vmatpush1.msra.mxu0 0.0
    %250 = vmatprep.subr.mxu0 0.0
    %251 = vmatpush1.msra.mxu0 0.0
    %252 = vmatprep.mubr.f32.mxu0 0.0
    %253 = vmatmul.mubr.f32.gmra.mrb[0].mxu0 %v164
    %v254 = vpop.f32.mrb[0].mxu0
    %v255 = vadd.f32 %v186, %v254
    %v256 = vpop.f32.mrb[0].mxu0
    %257 = vdwg.mxu0
    %v258 = vmax.f32 %v255, 0.0
    %v259 = vld [vmem:[#allocation8] sm:$0xff]
    %v260 = vld [vmem:[#allocation8 + $0x8] sm:$0xff]
    %v261 = vld [vmem:[#allocation8 + $0x10] sm:$0xff]
    %v262 = vld [vmem:[#allocation8 + $0x18] sm:$0xff]
    %v263 = vld [vmem:[#allocation8 + $0x20] sm:$0xff]
    %v264 = vld [vmem:[#allocation8 + $0x28] sm:$0xff]
    %v265 = vld [vmem:[#allocation8 + $0x30] sm:$0xff]
    %v266 = vld [vmem:[#allocation8 + $0x38] sm:$0xff]
    %v267 = vld [vmem:[#allocation8 + $0x40] sm:$0xff]
    %v268 = vld [vmem:[#allocation8 + $0x48] sm:$0xff]
    %v269 = vld [vmem:[#allocation8 + $0x50] sm:$0xff]
    %v270 = vld [vmem:[#allocation8 + $0x58] sm:$0xff]
    %v271 = vld [vmem:[#allocation8 + $0x60] sm:$0xff]
    %v272 = vld [vmem:[#allocation8 + $0x68] sm:$0xff]
    %v273 = vld [vmem:[#allocation8 + $0x70] sm:$0xff]
    %v274 = vld [vmem:[#allocation8 + $0x78] sm:$0xff]
    %v275 = vld [vmem:[%s6] sm:$0x1]
    %v277 = vlaneseq
    %v278 = vshrl.u32 %v277, 7
    %v279 = vsub.s32 0, %v278
    %v280 = vrot.slane %v275, %v279
    %282 = vmatprep.subr.mxu0 0.0
    %283 = vmatpush1.msra.mxu0 %v259
    %284 = vmatprep.subr.mxu0 0.0
    %285 = vmatpush1.msra.mxu0 %v260
    %286 = vmatprep.subr.mxu0 0.0
    %287 = vmatpush1.msra.mxu0 %v261
    %288 = vmatprep.subr.mxu0 0.0
    %289 = vmatpush1.msra.mxu0 %v262
    %290 = vmatprep.subr.mxu0 0.0
    %291 = vmatpush1.msra.mxu0 %v263
    %292 = vmatprep.subr.mxu0 0.0
    %293 = vmatpush1.msra.mxu0 %v264
    %294 = vmatprep.subr.mxu0 0.0
    %295 = vmatpush1.msra.mxu0 %v265
    %296 = vmatprep.subr.mxu0 0.0
    %297 = vmatpush1.msra.mxu0 %v266
    %298 = vmatprep.subr.mxu0 0.0
    %299 = vmatpush1.msra.mxu0 %v267
    %300 = vmatprep.subr.mxu0 0.0
    %301 = vmatpush1.msra.mxu0 %v268
    %302 = vmatprep.subr.mxu0 0.0
    %303 = vmatpush1.msra.mxu0 %v269
    %304 = vmatprep.subr.mxu0 0.0
    %305 = vmatpush1.msra.mxu0 %v270
    %306 = vmatprep.subr.mxu0 0.0
    %307 = vmatpush1.msra.mxu0 %v271
    %308 = vmatprep.subr.mxu0 0.0
    %309 = vmatpush1.msra.mxu0 %v272
    %310 = vmatprep.subr.mxu0 0.0
    %311 = vmatpush1.msra.mxu0 %v273
    %312 = vmatprep.subr.mxu0 0.0
    %313 = vmatpush1.msra.mxu0 %v274
    %314 = vmatprep.subr.mxu0 0.0
    %315 = vmatpush1.msra.mxu0 0.0
    %316 = vmatprep.subr.mxu0 0.0
    %317 = vmatpush1.msra.mxu0 0.0
    %318 = vmatprep.subr.mxu0 0.0
    %319 = vmatpush1.msra.mxu0 0.0
    %320 = vmatprep.subr.mxu0 0.0
    %321 = vmatpush1.msra.mxu0 0.0
    %322 = vmatprep.subr.mxu0 0.0
    %323 = vmatpush1.msra.mxu0 0.0
    %324 = vmatprep.subr.mxu0 0.0
    %325 = vmatpush1.msra.mxu0 0.0
    %326 = vmatprep.subr.mxu0 0.0
    %327 = vmatpush1.msra.mxu0 0.0
    %328 = vmatprep.subr.mxu0 0.0
    %329 = vmatpush1.msra.mxu0 0.0
    %330 = vmatprep.subr.mxu0 0.0
    %331 = vmatpush1.msra.mxu0 0.0
    %332 = vmatprep.subr.mxu0 0.0
    %333 = vmatpush1.msra.mxu0 0.0
    %334 = vmatprep.subr.mxu0 0.0
    %335 = vmatpush1.msra.mxu0 0.0
    %336 = vmatprep.subr.mxu0 0.0
    %337 = vmatpush1.msra.mxu0 0.0
    %338 = vmatprep.subr.mxu0 0.0
    %339 = vmatpush1.msra.mxu0 0.0
    %340 = vmatprep.subr.mxu0 0.0
    %341 = vmatpush1.msra.mxu0 0.0
    %342 = vmatprep.subr.mxu0 0.0
    %343 = vmatpush1.msra.mxu0 0.0
    %344 = vmatprep.subr.mxu0 0.0
    %345 = vmatpush1.msra.mxu0 0.0
    %346 = vmatprep.mubr.f32.mxu0 0.0
    %347 = vmatmul.mubr.f32.gmra.mrb[0].mxu0 %v258
    %v348 = vpop.f32.mrb[0].mxu0
    %v349 = vadd.f32 %v280, %v348
    %v350 = vpop.f32.mrb[0].mxu0
    %351 = vdwg.mxu0
    %352 = vst [vmem:[#allocation10] sm:$0xff] %v349
    // Predicated region
    $region46: #{tpu_custom_call.1} parent=1 // pred_check
      _
    $region47: #{tpu_custom_call.1} parent=1 // pred_check_branch
      %354 = sbr.rel (0) target = $region49
    $region48: #{tpu_custom_call.1} parent=1 // pred_region
      %s356 = ssub.s32 128, 128
      %357 = vsyncadd [#allocation4], %s356
      %s359 = sshll.u32 [#allocation10], 4
      %s360 = int_to_ptr.vmem [resolvable:$true] %s359
      %362 = dma.vmem_to_hbm [thread:$0]  %s360, 128, %s7, [#allocation4]
    $region49: #{tpu_custom_call.1} parent=1 // pred_fallthru
      _
    // Predicated region
    $region50: #{tpu_custom_call.1} parent=1 // pred_check
      _
    $region51: #{tpu_custom_call.1} parent=1 // pred_check_branch
      %364 = sbr.rel (0) target = $region53
    $region52: #{tpu_custom_call.1} parent=1 // pred_region
      %365 = dma.done [#allocation4], 128
    $region53: #{tpu_custom_call.1} parent=1 // pred_fallthru
      _
    %366 = vsyncpa [#allocation3], 1
    %367 = vsyncpa [#allocation6], 1
    %368 = vsyncpa [#allocation9], 1
    %369 = vsyncpa [#allocation4], 1

</llo_original>
